<compile_context>
chip_gen: v5e
topology: v5e:2x2
jax: 0.10.0
libtpu: 0.0.40
codegen_flags: <defaults>
</compile_context>

<pallas_src>
import functools

import jax
import jax.numpy as jnp
from jax import lax
from jax.experimental import pallas as pl
from jax.experimental.pallas import tpu as pltpu


def _round_up(x, m):
    return ((x + m - 1) // m) * m


def _sublane_multiple(itemsize):
    # f32 -> 8 rows per vreg, bf16 -> 16 (sublane-packed), int8 -> 32.
    return max(8, 32 // int(itemsize))


def _tile_bytes(rows, cols, itemsize):
    """VMEM footprint of a (rows, cols) array after (sublane, 128-lane) padding."""
    return (_round_up(max(rows, 1), _sublane_multiple(itemsize))
            * _round_up(max(cols, 1), 128) * int(itemsize))


def _vmem_capacity_bytes(default=64 << 20):
    """Generation-aware VMEM capacity (v5e/v6e: 128 MiB, v7x: 64 MiB)."""
    try:
        return int(pltpu.get_tpu_info().vmem_capacity_bytes)
    except Exception:
        return default  # conservative (v7x-sized) fallback


def _matchnet_kernel(f0_ref, f1_ref, out_ref, *, norm, row_chunk):
    # f0_ref:  (1, HWR, C)  rows j = f0 positions (PyTorch output channel axis)
    # f1_ref:  (1, C, TI)   cols i = f1 positions (PyTorch output spatial axis)
    # out_ref: (1, HWR, TI)
    hw_r = out_ref.shape[1]
    ti = out_ref.shape[2]
    f1 = f1_ref[0]  # (C, TI), loaded once and reused by every row chunk

    def corr_chunk(r, size):
        a = f0_ref[0, pl.ds(r, size), :]  # (size, C) -- plain (M,K)x(K,N) MXU op
        return jnp.dot(a, f1, preferred_element_type=jnp.float32)  # (size, TI) f32

    n_full = hw_r // row_chunk
    rem = hw_r - n_full * row_chunk

    if n_full == 1 and rem == 0:
        # Single chunk: straight-line; the relu'd correlation is materialized once.
        n = corr_chunk(0, hw_r)
        if norm:
            n = jnp.maximum(n, 0.0)
            inv = lax.rsqrt(jnp.sum(n * n, axis=0, keepdims=True) + 1e-6)
            n = n * inv
        out_ref[0] = n.astype(out_ref.dtype)
        return

    # Pass 1: stream the dot in row chunks.  Each chunk is relu'd and written to
    # the output block exactly once while the per-column sum of squares (the
    # PyTorch dim-1 reduction) accumulates from the same f32 values.
    def write_chunk(r, size, ssq):
        p = corr_chunk(r, size)
        if norm:
            p = jnp.maximum(p, 0.0)
            ssq = ssq + jnp.sum(p * p, axis=0, keepdims=True)
        out_ref[0, pl.ds(r, size), :] = p.astype(out_ref.dtype)
        return ssq

    def body1(i, ssq):
        r = pl.multiple_of(i * row_chunk, row_chunk)
        return write_chunk(r, row_chunk, ssq)

    ssq = lax.fori_loop(0, n_full, body1, jnp.zeros((1, ti), jnp.float32))
    if rem:
        ssq = write_chunk(hw_r - rem, rem, ssq)

    if not norm:
        return

    inv = lax.rsqrt(ssq + 1e-6)  # EUP rsqrt instead of sqrt + divide

    # Pass 2: rescale the stored slab in place (one read + one write per chunk).
    def scale_chunk(r, size):
        v = out_ref[0, pl.ds(r, size), :].astype(jnp.float32)
        out_ref[0, pl.ds(r, size), :] = (v * inv).astype(out_ref.dtype)

    def body2(i, carry):
        r = pl.multiple_of(i * row_chunk, row_chunk)
        scale_chunk(r, row_chunk)
        return carry

    lax.fori_loop(0, n_full, body2, 0)
    if rem:
        scale_chunk(hw_r - rem, rem)


def _choose_i_tile(hw_pad, batch, budget_bytes, need_fn, min_ti):
    """Pick the output i-tile (lane) width.

    Priorities: fit the VMEM budget (hard) > even total step count >= 2 (v7x
    megacore, harmless on 1-TC chips) > write-contiguity floor (>=256 f32 /
    >=512 bf16 lanes) > largest tile (fewer grid steps, longer contiguous HBM
    write segments).
    """
    m = hw_pad // 128
    cands = sorted({128 * d for d in range(1, m + 1) if m % d == 0}, reverse=True)
    fitting = [t for t in cands if need_fn(t) <= budget_bytes]
    if not fitting:
        fitting = [128]
    floor = min(min_ti, hw_pad)

    def score(t):
        steps = batch * (hw_pad // t)
        megacore_ok = steps >= 2 and steps % 2 == 0
        return (megacore_ok, t >= floor, t)

    ti = max(fitting, key=score)
    return ti, need_fn(ti)


def matchnet(f0, f1, *, norm=True, out_dtype=jnp.bfloat16, vmem_budget_bytes=None):
    """Pallas implementation of MatchNet.forward.

    Args:
      f0, f1: (b, c, h, w) arrays (NCHW, as in PyTorch).
      norm: apply ReLU + L2 normalization over the output channel axis.
      out_dtype: output dtype.  Defaults to bfloat16 (the kernel is
        HBM-writeback bound, so halving output bytes is the single biggest
        lever); pass jnp.float32 to match PyTorch numerics exactly.
      vmem_budget_bytes: VMEM budget for the pipelined blocks; defaults to
        ~37.5% of this generation's VMEM capacity.

    Returns:
      (b, h*w, h, w) correlation map, matching the PyTorch module layout.
    """
    b, c, h, w = f0.shape
    hw = h * w
    out_dtype = jnp.dtype(out_dtype)

    # Keep native dtype (no f32 upcast round-trip); sanitize exotic dtypes only.
    if f0.dtype not in (jnp.dtype(jnp.float32), jnp.dtype(jnp.bfloat16)):
        f0 = f0.astype(jnp.float32)
        f1 = f1.astype(jnp.float32)
    in_bytes = f0.dtype.itemsize
    out_bytes = out_dtype.itemsize

    # Lane-pad the f1 spatial axis (output lane axis) to a multiple of 128 and
    # row-pad the f0 spatial axis (output sublane axis) to the sublane multiple
    # of the widest-packed dtype involved; padding is sliced off afterwards.
    hw_pad = pl.cdiv(hw, 128) * 128
    granule = max(_sublane_multiple(in_bytes), _sublane_multiple(out_bytes))
    hw_rpad = _round_up(hw, granule)

    # Pre-transpose f0 to (b, hw, c) so the in-kernel matmul needs no lhs
    # relayout (wrapper cost is only c*hw elements).
    f0_t = jnp.swapaxes(f0.reshape(b, c, hw), 1, 2)  # (b, hw, c)
    f1_c = f1.reshape(b, c, hw)                      # (b, c, hw)
    if hw_rpad != hw:
        f0_t = jnp.pad(f0_t, ((0, 0), (0, hw_rpad - hw), (0, 0)))
    if hw_pad != hw:
        f1_c = jnp.pad(f1_c, ((0, 0), (0, 0), (0, hw_pad - hw)))

    # Row-chunk size for the in-kernel streaming passes; bounds the f32
    # intermediate footprint to (row_chunk, TI).
    row_chunk = hw_rpad if hw_rpad <= 512 else 512

    cap = _vmem_capacity_bytes()
    if vmem_budget_bytes is None:
        vmem_budget_bytes = (3 * cap) // 8  # ~37.5% of physical VMEM for blocks

    def need(ti):
        blocks = (_tile_bytes(hw_rpad, c, in_bytes)        # f0 tile (ii-invariant)
                  + _tile_bytes(c, ti, in_bytes)           # f1 i-tile
                  + _tile_bytes(hw_rpad, ti, out_bytes))   # output slab
        # f32 compute intermediates: chunk dot result + one temp + (1, TI) ssq.
        interm = 2 * _tile_bytes(row_chunk, ti, 4) + _tile_bytes(1, ti, 4)
        return 2 * blocks + interm                         # x2: double buffering

    min_ti = 512 if out_bytes <= 2 else 256
    ti, need_bytes = _choose_i_tile(hw_pad, b, vmem_budget_bytes, need, min_ti)
    n_i_tiles = hw_pad // ti

    # Scoped-VMEM limit: blocks + intermediates + headroom, capped at ~80% of
    # the generation's physical VMEM (never clipped below what we need).
    vmem_limit = min(max(need_bytes + (8 << 20), 32 << 20), (4 * cap) // 5)
    vmem_limit = int(max(vmem_limit, min(need_bytes + (2 << 20), cap - (2 << 20))))

    kernel = functools.partial(_matchnet_kernel, norm=norm, row_chunk=row_chunk)
    out_flat = pl.pallas_call(
        kernel,
        out_shape=jax.ShapeDtypeStruct((b, hw_rpad, hw_pad), out_dtype),
        grid=(b, n_i_tiles),
        in_specs=[
            pl.BlockSpec((1, hw_rpad, c), lambda bi, ii: (bi, 0, 0)),  # f0: full rows, reused
            pl.BlockSpec((1, c, ti), lambda bi, ii: (bi, 0, ii)),      # f1: i-tile
        ],
        out_specs=pl.BlockSpec((1, hw_rpad, ti), lambda bi, ii: (bi, 0, ii)),
        compiler_params=pltpu.CompilerParams(
            dimension_semantics=("parallel", "parallel"),
            vmem_limit_bytes=vmem_limit,
        ),
    )(f0_t, f1_c)

    if hw_rpad != hw or hw_pad != hw:
        out_flat = out_flat[:, :hw, :hw]

    # Glue: restore the PyTorch output layout (b, h*w, h, w).
    return out_flat.reshape(b, hw, h, w)


def _matchnet_ref(f0, f1, norm=True):
    """Pure-JAX reference mirroring the PyTorch code line-by-line."""
    b, c, h, w = f0.shape
    f0_c = f0.reshape(b, c, h * w)
    f1_c = jnp.swapaxes(f1.reshape(b, c, h * w), 1, 2)
    f_mul = jnp.einsum("bic,bcj->bij", f1_c, f0_c)            # (b, hw, hw)
    corr = f_mul.reshape(b, h, w, h * w)
    corr = jnp.swapaxes(corr, 2, 3)
    corr = jnp.swapaxes(corr, 1, 2)                           # (b, hw, h, w)
    if norm:
        corr = jnp.maximum(corr, 0.0)
        denom = jnp.sqrt(jnp.sum(corr * corr, axis=1, keepdims=True) + 1e-6)
        corr = corr / denom
    return corr


if __name__ == "__main__":
    key = jax.random.PRNGKey(0)
    k0, k1, k2, k3, k4, k5 = jax.random.split(key, 6)

    # Case 1: lane-aligned spatial size (hw = 256), default bf16 output
    # (the big writeback-bound lever from the review).
    b, c, h, w = 2, 4, 16, 16
    f0 = jax.random.normal(k0, (b, c, h, w), dtype=jnp.float32)
    f1 = jax.random.normal(k1, (b, c, h, w), dtype=jnp.float32)
    ref = _matchnet_ref(f0, f1, norm=True)
    out_bf16 = jax.block_until_ready(matchnet(f0, f1, norm=True))
    assert out_bf16.shape == (b, h * w, h, w), out_bf16.shape
    assert out_bf16.dtype == jnp.bfloat16, out_bf16.dtype
    err1 = float(jnp.max(jnp.abs(out_bf16.astype(jnp.float32) - ref)))
    assert jnp.allclose(out_bf16.astype(jnp.float32), ref, atol=2e-2, rtol=2e-2), err1

    # Case 2: float32 output path (matches PyTorch numerics).
    out_f32 = jax.block_until_ready(matchnet(f0, f1, norm=True, out_dtype=jnp.float32))
    assert out_f32.dtype == jnp.float32
    err2 = float(jnp.max(jnp.abs(out_f32 - ref)))
    assert jnp.allclose(out_f32, ref, atol=1e-4, rtol=1e-4), err2

    # Case 3: non-128-multiple spatial size (hw = 100) exercises lane + row padding.
    b2, c2, h2, w2 = 2, 4, 10, 10
    g0 = jax.random.normal(k2, (b2, c2, h2, w2), dtype=jnp.float32)
    g1 = jax.random.normal(k3, (b2, c2, h2, w2), dtype=jnp.float32)
    out2 = jax.block_until_ready(matchnet(g0, g1, norm=True, out_dtype=jnp.float32))
    ref2 = _matchnet_ref(g0, g1, norm=True)
    assert out2.shape == (b2, h2 * w2, h2, w2), out2.shape
    err3 = float(jnp.max(jnp.abs(out2 - ref2)))
    assert jnp.allclose(out2, ref2, atol=1e-4, rtol=1e-4), err3

    # Case 4: larger spatial size (hw = 1024) exercises the streamed row-chunk
    # passes (2 chunks of 512 rows) and the lane-axis i-tiling (2 grid steps).
    b3, c3, h3, w3 = 1, 8, 32, 32
    q0 = jax.random.normal(k4, (b3, c3, h3, w3), dtype=jnp.float32)
    q1 = jax.random.normal(k5, (b3, c3, h3, w3), dtype=jnp.float32)
    out3 = jax.block_until_ready(matchnet(q0, q1, norm=True, out_dtype=jnp.float32))
    ref3 = _matchnet_ref(q0, q1, norm=True)
    assert out3.shape == (b3, h3 * w3, h3, w3), out3.shape
    err4 = float(jnp.max(jnp.abs(out3 - ref3)))
    assert jnp.allclose(out3, ref3, atol=1e-4, rtol=1e-4), err4

    print("KERNEL_OK")
</pallas_src>

<mosaic_0001>
module attributes {stable_mosaic.version = 11 : i64} {
  func.func @_matchnet_kernel(%arg0: i32, %arg1: i32, %arg2: memref<1x256x4xf32, #tpu.memory_space<vmem>>, %arg3: memref<1x4x256xf32, #tpu.memory_space<vmem>>, %arg4: memref<1x256x256xbf16, #tpu.memory_space<vmem>>) attributes {dimension_semantics = [#tpu.dimension_semantics<parallel>, #tpu.dimension_semantics<parallel>], iteration_bounds = array<i64: 2, 1>, scalar_prefetch = 0 : i64, scratch_operands = 0 : i64, tpu.core_type = #tpu.core_type<tc>, window_params = [{transform_indices = @transform_0, window_bounds = array<i64: 1, 256, 4>}, {transform_indices = @transform_1, window_bounds = array<i64: 1, 4, 256>}, {transform_indices = @transform_2, window_bounds = array<i64: 1, 256, 256>}]} {
    %c0 = arith.constant 0 : index
    %c0_0 = arith.constant 0 : index
    %c0_1 = arith.constant 0 : index
    %0 = vector.load %arg3[%c0, %c0_0, %c0_1] : memref<1x4x256xf32, #tpu.memory_space<vmem>>, vector<1x4x256xf32>
    %1 = vector.shape_cast %0 : vector<1x4x256xf32> to vector<4x256xf32>
    %c0_2 = arith.constant 0 : index
    %c0_3 = arith.constant 0 : index
    %c0_4 = arith.constant 0 : index
    %2 = vector.load %arg2[%c0_2, %c0_3, %c0_4] : memref<1x256x4xf32, #tpu.memory_space<vmem>>, vector<1x256x4xf32>
    %3 = vector.shape_cast %2 : vector<1x256x4xf32> to vector<256x4xf32>
    %cst = arith.constant dense<0.000000e+00> : vector<256x256xf32>
    %4 = tpu.matmul %3, %1, %cst {dimension_numbers = #tpu.dot_dimension_numbers<[1], [0], [0], [1], [0, 0, 1, 1], [], []>} : vector<256x4xf32>, vector<4x256xf32>, vector<256x256xf32> -> vector<256x256xf32>
    %cst_5 = arith.constant 0.000000e+00 : f32
    %5 = vector.broadcast %cst_5 : f32 to vector<256x256xf32>
    %6 = arith.maximumf %4, %5 : vector<256x256xf32>
    %7 = arith.mulf %6, %6 : vector<256x256xf32>
    %cst_6 = arith.constant dense<0.000000e+00> : vector<256xf32>
    %8 = vector.multi_reduction <add>, %7, %cst_6 [0] : vector<256x256xf32> to vector<256xf32>
    %9 = vector.shape_cast %8 : vector<256xf32> to vector<1x256xf32>
    %cst_7 = arith.constant 9.99999997E-7 : f32
    %10 = vector.broadcast %cst_7 : f32 to vector<1x256xf32>
    %11 = arith.addf %9, %10 : vector<1x256xf32>
    %12 = math.rsqrt %11 : vector<1x256xf32>
    %13 = vector.broadcast %12 : vector<1x256xf32> to vector<256x256xf32>
    %14 = arith.mulf %6, %13 : vector<256x256xf32>
    %15 = arith.truncf %14 : vector<256x256xf32> to vector<256x256xbf16>
    %c0_8 = arith.constant 0 : index
    %c0_9 = arith.constant 0 : index
    %c0_10 = arith.constant 0 : index
    %16 = vector.load %arg4[%c0_8, %c0_9, %c0_10] : memref<1x256x256xbf16, #tpu.memory_space<vmem>>, vector<1x256x256xbf16>
    %17 = vector.shape_cast %16 : vector<1x256x256xbf16> to vector<256x256xbf16>
    %18 = vector.shape_cast %15 : vector<256x256xbf16> to vector<1x256x256xbf16>
    tpu.vector_store %arg4[%c0_8, %c0_9, %c0_10], %18 {strides = array<i32>} : memref<1x256x256xbf16, #tpu.memory_space<vmem>>, vector<1x256x256xbf16>,
    return
  }
  func.func @transform_0(%arg0: i32, %arg1: i32) -> (i32, i32, i32) {
    %c0_i32 = arith.constant 0 : i32
    %c0_i32_0 = arith.constant 0 : i32
    %c0_i32_1 = arith.constant 0 : i32
    return %arg0, %c0_i32, %c0_i32_0 : i32, i32, i32
  }
  func.func @transform_1(%arg0: i32, %arg1: i32) -> (i32, i32, i32) {
    %c0_i32 = arith.constant 0 : i32
    %c0_i32_0 = arith.constant 0 : i32
    return %arg0, %c0_i32, %arg1 : i32, i32, i32
  }
  func.func @transform_2(%arg0: i32, %arg1: i32) -> (i32, i32, i32) {
    %c0_i32 = arith.constant 0 : i32
    %c0_i32_0 = arith.constant 0 : i32
    return %arg0, %c0_i32, %arg1 : i32, i32, i32
  }
}

</mosaic_0001>

<llo_original>
// kernel: tpu_custom_call.1
$region0: #{tpu_custom_call.1}
  #allocation0 [shape = 'u32[]', space=smem, size = 0x4, offset = 0x4, fixed_abs, tag = 'smem constant byte address 0x4 - core index']
  #allocation1 [shape = 'u32[72,128]{1,0:T(1,128)}', space=vmem, size = 0x9000, scoped, tag = 'internal scratch']
  %s0 = inlined_call_operand.vmem [shape: f32[2,256,4], index: 0, kind: input, shape index: {}]
  %s1 = inlined_call_operand.vmem [shape: f32[2,4,256], index: 1, kind: input, shape index: {}]
  %s2 = inlined_call_operand.hbm [shape: bf16[2,256,256], index: 2, kind: output, shape index: {}]
  %s3 = sld [smem:[#allocation0]]
  $region41: #{tpu_custom_call.1} parent=0
    _
  %s5 = ssub.s32 1, %s3
  %s6 = scalar_select 0, %s5, %s3
  $region1: #{tpu_custom_call.1} parent=0
    #allocation2 [shape = 'u8[262144]{0}', space=vmem, size = 0x40000, scoped, tag = 'output window, operand 0']
    #allocation3 [shape = 's32[2]{0}', space=sflag, size = 0x8, scoped, tag = 'scoped memory for tpu_custom_call.1']
    %7 = vsyncpa [#allocation3], 0
    %s8 = scalar_lea.sflag [#allocation3], 1
    %9 = vsyncpa %s8, 0
    loop: start=0, step=1, limit=4
    $region2: #{tpu_custom_call.1} parent=1 // loop_pre_header
      _
    $region3: #{tpu_custom_call.1} parent=1 // loop_header
      %s11 = sphi 0, %s15
      %p12 = scmp.ge.s32.totalorder %s11, 4
      %s18 = sphi 0, %s30
      %s19 = sphi 0, %s26
      %s20 = sphi 0, %s18
      %s21 = sphi 0, %s19
      %s22 = sphi 0, %s20
      %s23 = sphi 0, %s21
      %s33 = sphi 0, %s35
      %s36 = sphi 0, %s33
      %s37 = sphi 0, %s36
      %s53 = sphi 0, %s37
      %s61 = sphi 0, %s63
      %s64 = sphi 0, %s61
      %s65 = sphi 0, %s64
      %s81 = sphi 0, %s65
      %s89 = sphi 0, %s91
      %s92 = sphi 0, %s89
      %s93 = sphi 0, %s92
      %s109 = sphi 0, %s93
    $region4: #{tpu_custom_call.1} parent=1 // loop_header_branch
      %14 = sbr.rel (%p12) target = $region8
    $region5: #{tpu_custom_call.1} parent=1 // loop_body
      %s16 = ssub.s32 %s11, 1
      %s17 = ssub.s32 %s11, 2
      %s24 = sadd.s32 1, %s19
      %p25 = scmp.ge.s32.totalorder %s24, 1
      %s26 = scalar_select %p25, 0, %s24
      %s27 = sadd.s32 1, %s18
      %s28 = scalar_select %p25, %s27, %s18
      %p29 = scmp.ge.s32.totalorder %s28, 2
      %s30 = scalar_select %p29, 0, %s28
      %s31 = ssub.s32 %s18, %s30
      %p32 = scmp.eq.s32.totalorder %s31, 0
      %s34 = sadd.s32 %s33, 1
      %s35 = scalar_select %p32, %s33, %s34
      %p38 = pneg %p32
      %p39 = scmp.eq.s32.totalorder %s11, 1
      %p40 = por %p38, %p39
      %p41 = scmp.ne.s32.totalorder %s33, %s36
      %p42 = scmp.eq.s32.totalorder %s11, 0
      %p43 = por %p41, %p42
      %p44 = scmp.ne.s32.totalorder %s33, %s36
      %p45 = scmp.eq.s32.totalorder %s16, 1
      %p46 = por %p44, %p45
      %p47 = scmp.ne.s32.totalorder %s36, %s37
      %p48 = scmp.eq.s32.totalorder %s16, 0
      %p49 = por %p47, %p48
      %p50 = scmp.ne.s32.totalorder %s36, %s37
      %p51 = scmp.eq.s32.totalorder %s17, 1
      %p52 = por %p50, %p51
      %p54 = scmp.ne.s32.totalorder %s37, %s53
      %p55 = scmp.eq.s32.totalorder %s17, 0
      %p56 = por %p54, %p55
      %s57 = ssub.s32 %s18, %s30
      %s58 = ssub.s32 %s19, %s26
      %s59 = sor.u32 %s57, %s58
      %p60 = scmp.eq.s32.totalorder %s59, 0
      %s62 = sadd.s32 %s61, 1
      %s63 = scalar_select %p60, %s61, %s62
      %p66 = pneg %p60
      %p67 = scmp.eq.s32.totalorder %s11, 1
      %p68 = por %p66, %p67
      %p69 = scmp.ne.s32.totalorder %s61, %s64
      %p70 = scmp.eq.s32.totalorder %s11, 0
      %p71 = por %p69, %p70
      %p72 = scmp.ne.s32.totalorder %s61, %s64
      %p73 = scmp.eq.s32.totalorder %s16, 1
      %p74 = por %p72, %p73
      %p75 = scmp.ne.s32.totalorder %s64, %s65
      %p76 = scmp.eq.s32.totalorder %s16, 0
      %p77 = por %p75, %p76
      %p78 = scmp.ne.s32.totalorder %s64, %s65
      %p79 = scmp.eq.s32.totalorder %s17, 1
      %p80 = por %p78, %p79
      %p82 = scmp.ne.s32.totalorder %s65, %s81
      %p83 = scmp.eq.s32.totalorder %s17, 0
      %p84 = por %p82, %p83
      %s85 = ssub.s32 %s18, %s30
      %s86 = ssub.s32 %s19, %s26
      %s87 = sor.u32 %s85, %s86
      %p88 = scmp.eq.s32.totalorder %s87, 0
      %s90 = sadd.s32 %s89, 1
      %s91 = scalar_select %p88, %s89, %s90
      %p94 = pneg %p88
      %p95 = scmp.eq.s32.totalorder %s11, 1
      %p96 = por %p94, %p95
      %p97 = scmp.ne.s32.totalorder %s89, %s92
      %p98 = scmp.eq.s32.totalorder %s11, 0
      %p99 = por %p97, %p98
      %p100 = scmp.ne.s32.totalorder %s89, %s92
      %p101 = scmp.eq.s32.totalorder %s16, 1
      %p102 = por %p100, %p101
      %p103 = scmp.ne.s32.totalorder %s92, %s93
      %p104 = scmp.eq.s32.totalorder %s16, 0
      %p105 = por %p103, %p104
      %p106 = scmp.ne.s32.totalorder %s92, %s93
      %p107 = scmp.eq.s32.totalorder %s17, 1
      %p108 = por %p106, %p107
      %p110 = scmp.ne.s32.totalorder %s93, %s109
      %p111 = scmp.eq.s32.totalorder %s17, 0
      %p112 = por %p110, %p111
      %p113 = scmp.le.s32.totalorder 1, %s11
      %p114 = scmp.lt.s32.totalorder %s11, 3
      %p115 = pnand %p113, %p114
      %p116 = pneg %p115
      // Predicated region
      $region9: #{tpu_custom_call.1} parent=5 // pred_check
        _
      $region10: #{tpu_custom_call.1} parent=5 // pred_check_branch
        %118 = sbr.rel (%p115) target = $region12
      $region11: #{tpu_custom_call.1} parent=5 // pred_region
        %s119 = ssub.s32 %s11, 1
      $region12: #{tpu_custom_call.1} parent=5 // pred_fallthru
        _
      %p120 = scmp.lt.s32.totalorder %s11, 2
      // Predicated region
      $region13: #{tpu_custom_call.1} parent=5 // pred_check
        %p121 = pneg %p120
      $region14: #{tpu_custom_call.1} parent=5 // pred_check_branch
        %123 = sbr.rel (%p121) target = $region16
      $region15: #{tpu_custom_call.1} parent=5 // pred_region
        // Predicated region
        $region17: #{tpu_custom_call.1} parent=15 // pred_check
          %p124 = pneg %p43
        $region18: #{tpu_custom_call.1} parent=15 // pred_check_branch
          %126 = sbr.rel (%p124) target = $region20
        $region19: #{tpu_custom_call.1} parent=15 // pred_region
          %p127 = scmp.lt.s32.totalorder %s18, 1
          %s128 = scalar_select %p127, %s18, 1
          %s129 = smul.addr %s128, 32
          %s130 = smul.addr %s129, 8
          %s131 = scalar_lea.vmem %s0, %s130
        $region20: #{tpu_custom_call.1} parent=15 // pred_fallthru
          _
        // Predicated region
        $region21: #{tpu_custom_call.1} parent=15 // pred_check
          %p132 = pneg %p71
        $region22: #{tpu_custom_call.1} parent=15 // pred_check_branch
          %134 = sbr.rel (%p132) target = $region24
        $region23: #{tpu_custom_call.1} parent=15 // pred_region
          %s135 = smul.u32 2, %s19
          %p136 = scmp.lt.s32.totalorder %s18, 1
          %s137 = scalar_select %p136, %s18, 1
          %p138 = scmp.lt.s32.totalorder %s135, 1
          %s139 = scalar_select %p138, %s135, 1
          %s140 = smul.addr %s137, 2
          %s141 = sadd.s32 %s139, %s140
          %s142 = smul.addr %s141, 4
          %s143 = scalar_lea.vmem %s1, %s142
          %s144 = smul.u32 2, %s19
        $region24: #{tpu_custom_call.1} parent=15 // pred_fallthru
          _
      $region16: #{tpu_custom_call.1} parent=5 // pred_fallthru
        _
      %p145 = scmp.le.s32.totalorder 1, %s11
      %p146 = scmp.lt.s32.totalorder %s11, 3
      %p147 = pnand %p145, %p146
      %p148 = pneg %p147
      // Predicated region
      $region25: #{tpu_custom_call.1} parent=5 // pred_check
        _
      $region26: #{tpu_custom_call.1} parent=5 // pred_check_branch
        %150 = sbr.rel (%p147) target = $region28
      $region27: #{tpu_custom_call.1} parent=5 // pred_region
        %s151 = ssub.s32 %s11, 1
        %p152 = scmp.lt.s32.totalorder %s20, 1
        %s153 = scalar_select %p152, %s20, 1
        %s154 = smul.addr %s153, 32
        %s155 = smul.addr %s154, 8
        %s156 = scalar_lea.vmem %s0, %s155
        %p157 = pneg %p49
        %p158 = pneg %p46
        %s159 = smul.u32 2, %s21
        %p160 = scmp.lt.s32.totalorder %s20, 1
        %s161 = scalar_select %p160, %s20, 1
        %p162 = scmp.lt.s32.totalorder %s159, 1
        %s163 = scalar_select %p162, %s159, 1
        %s164 = smul.addr %s161, 2
        %s165 = sadd.s32 %s163, %s164
        %s166 = smul.addr %s165, 4
        %s167 = scalar_lea.vmem %s1, %s166
        %p168 = pneg %p77
        %p169 = pneg %p74
        %p170 = pneg %p105
        %p171 = pneg %p102
        %s172 = sand.u32 %s92, 1
        %s173 = scalar_lea.sflag [#allocation3], %s172
        %s174 = sand.u32 %s92, 1
        %s175 = smul.addr %s174, 256
        %s176 = scalar_lea.vmem [#allocation2], %s175
        %p177 = scmp.lt.s32.totalorder %s20, 1
        %s178 = scalar_select %p177, %s20, 1
        %s179 = smul.addr %s178, 32
        %s180 = smul.addr %s179, 8
        %s181 = scalar_lea.vmem %s0, %s180
        %s182 = smul.u32 2, %s21
        %p183 = scmp.lt.s32.totalorder %s20, 1
        %s184 = scalar_select %p183, %s20, 1
        %p185 = scmp.lt.s32.totalorder %s182, 1
        %s186 = scalar_select %p185, %s182, 1
        %s187 = smul.addr %s184, 2
        %s188 = sadd.s32 %s186, %s187
        %s189 = smul.addr %s188, 4
        %s190 = scalar_lea.vmem %s1, %s189
        %s191 = smul.u32 2, %s21
        %s192 = smul.u32 2, %s21
        %v193 = vld [vmem:[%s190] sm:$0xff]
        %v194 = vld [vmem:[%s181] sm:$0xff]
        %v195 = vld [vmem:[%s181 + $0x8] sm:$0xff]
        %v196 = vld [vmem:[%s181 + $0x10] sm:$0xff]
        %v197 = vld [vmem:[%s181 + $0x18] sm:$0xff]
        %v198 = vld [vmem:[%s181 + $0x20] sm:$0xff]
        %v199 = vld [vmem:[%s181 + $0x28] sm:$0xff]
        %v200 = vld [vmem:[%s181 + $0x30] sm:$0xff]
        %v201 = vld [vmem:[%s181 + $0x38] sm:$0xff]
        %v202 = vld [vmem:[%s181 + $0x40] sm:$0xff]
        %v203 = vld [vmem:[%s181 + $0x48] sm:$0xff]
        %v204 = vld [vmem:[%s181 + $0x50] sm:$0xff]
        %v205 = vld [vmem:[%s181 + $0x58] sm:$0xff]
        %v206 = vld [vmem:[%s181 + $0x60] sm:$0xff]
        %v207 = vld [vmem:[%s181 + $0x68] sm:$0xff]
        %v208 = vld [vmem:[%s181 + $0x70] sm:$0xff]
        %v209 = vld [vmem:[%s181 + $0x78] sm:$0xff]
        %v210 = vld [vmem:[%s181 + $0x80] sm:$0xff]
        %v211 = vld [vmem:[%s181 + $0x88] sm:$0xff]
        %v212 = vld [vmem:[%s181 + $0x90] sm:$0xff]
        %v213 = vld [vmem:[%s181 + $0x98] sm:$0xff]
        %v214 = vld [vmem:[%s181 + $0xa0] sm:$0xff]
        %v215 = vld [vmem:[%s181 + $0xa8] sm:$0xff]
        %v216 = vld [vmem:[%s181 + $0xb0] sm:$0xff]
        %v217 = vld [vmem:[%s181 + $0xb8] sm:$0xff]
        %v218 = vld [vmem:[%s181 + $0xc0] sm:$0xff]
        %v219 = vld [vmem:[%s181 + $0xc8] sm:$0xff]
        %v220 = vld [vmem:[%s181 + $0xd0] sm:$0xff]
        %v221 = vld [vmem:[%s181 + $0xd8] sm:$0xff]
        %v222 = vld [vmem:[%s181 + $0xe0] sm:$0xff]
        %v223 = vld [vmem:[%s181 + $0xe8] sm:$0xff]
        %v224 = vld [vmem:[%s181 + $0xf0] sm:$0xff]
        %v225 = vld [vmem:[%s181 + $0xf8] sm:$0xff]
        %227 = vst [vmem:[#allocation1] ss:$2 sm:$0xff] %v193
        %v228 = vld.sshfl [vmem:[#allocation1] sm:$0xff pattern:$0x75316420]
        %v229 = vld.sshfl [vmem:[#allocation1 + $0x8] sm:$0xff pattern:$0x75316420]
        %vm230 = vcmask 31744
        %v232 = vsel %vm230, %v194, 0
        %v235 = vsel %vm230, %v195, 0
        %v238 = vsel %vm230, %v196, 0
        %v241 = vsel %vm230, %v197, 0
        %v244 = vsel %vm230, %v198, 0
        %v247 = vsel %vm230, %v199, 0
        %v250 = vsel %vm230, %v200, 0
        %v253 = vsel %vm230, %v201, 0
        %v256 = vsel %vm230, %v202, 0
        %v259 = vsel %vm230, %v203, 0
        %v262 = vsel %vm230, %v204, 0
        %v265 = vsel %vm230, %v205, 0
        %v268 = vsel %vm230, %v206, 0
        %v271 = vsel %vm230, %v207, 0
        %v274 = vsel %vm230, %v208, 0
        %v277 = vsel %vm230, %v209, 0
        %v280 = vsel %vm230, %v210, 0
        %v283 = vsel %vm230, %v211, 0
        %v286 = vsel %vm230, %v212, 0
        %v289 = vsel %vm230, %v213, 0
        %v292 = vsel %vm230, %v214, 0
        %v295 = vsel %vm230, %v215, 0
        %v298 = vsel %vm230, %v216, 0
        %v301 = vsel %vm230, %v217, 0
        %v304 = vsel %vm230, %v218, 0
        %v307 = vsel %vm230, %v219, 0
        %v310 = vsel %vm230, %v220, 0
        %v313 = vsel %vm230, %v221, 0
        %v316 = vsel %vm230, %v222, 0
        %v319 = vsel %vm230, %v223, 0
        %v322 = vsel %vm230, %v224, 0
        %v325 = vsel %vm230, %v225, 0
        %vm327 = vcmask 1043456
        %v328 = vsel %vm327, %v228, 0
        %v330 = vsel %vm327, %v229, 0
        %332 = vmatpush.msra.mxu0 0.0
        %333 = vmatpush.msra.mxu0 0.0
        %334 = vmatpush.msra.mxu0 0.0
        %335 = vmatpush.msra.mxu0 0.0
        %336 = vmatpush.msra.mxu0 0.0
        %337 = vmatpush.msra.mxu0 0.0
        %338 = vmatpush.msra.mxu0 0.0
        %339 = vmatpush.msra.mxu0 0.0
        %340 = vmatpush.msra.mxu0 0.0
        %341 = vmatpush.msra.mxu0 0.0
        %342 = vmatpush.msra.mxu0 0.0
        %343 = vmatpush.msra.mxu0 0.0
        %344 = vmatpush.msra.mxu0 0.0
        %345 = vmatpush.msra.mxu0 0.0
        %346 = vmatpush.msra.mxu0 0.0
        %347 = vmatpush.msra.mxu0 %v328
        %348 = vmatmul.f32.gmra.mxu0 %v232
        %v349 = vpop.f32.mrf.mxu0
        %v350 = vadd.f32 0.0, %v349
        %351 = vmatmul.f32.gmra.mxu0 %v235
        %v352 = vpop.f32.mrf.mxu0
        %v353 = vadd.f32 0.0, %v352
        %354 = vmatmul.f32.gmra.mxu0 %v238
        %v355 = vpop.f32.mrf.mxu0
        %v356 = vadd.f32 0.0, %v355
        %357 = vmatmul.f32.gmra.mxu0 %v241
        %v358 = vpop.f32.mrf.mxu0
        %v359 = vadd.f32 0.0, %v358
        %360 = vmatmul.f32.gmra.mxu0 %v244
        %v361 = vpop.f32.mrf.mxu0
        %v362 = vadd.f32 0.0, %v361
        %363 = vmatmul.f32.gmra.mxu0 %v247
        %v364 = vpop.f32.mrf.mxu0
        %v365 = vadd.f32 0.0, %v364
        %366 = vmatmul.f32.gmra.mxu0 %v250
        %v367 = vpop.f32.mrf.mxu0
        %v368 = vadd.f32 0.0, %v367
        %369 = vmatmul.f32.gmra.mxu0 %v253
        %v370 = vpop.f32.mrf.mxu0
        %v371 = vadd.f32 0.0, %v370
        %372 = vmatmul.f32.gmra.mxu0 %v256
        %v373 = vpop.f32.mrf.mxu0
        %v374 = vadd.f32 0.0, %v373
        %375 = vmatmul.f32.gmra.mxu0 %v259
        %v376 = vpop.f32.mrf.mxu0
        %v377 = vadd.f32 0.0, %v376
        %378 = vmatmul.f32.gmra.mxu0 %v262
        %v379 = vpop.f32.mrf.mxu0
        %v380 = vadd.f32 0.0, %v379
        %381 = vmatmul.f32.gmra.mxu0 %v265
        %v382 = vpop.f32.mrf.mxu0
        %v383 = vadd.f32 0.0, %v382
        %384 = vmatmul.f32.gmra.mxu0 %v268
        %v385 = vpop.f32.mrf.mxu0
        %v386 = vadd.f32 0.0, %v385
        %387 = vmatmul.f32.gmra.mxu0 %v271
        %v388 = vpop.f32.mrf.mxu0
        %v389 = vadd.f32 0.0, %v388
        %390 = vmatmul.f32.gmra.mxu0 %v274
        %v391 = vpop.f32.mrf.mxu0
        %v392 = vadd.f32 0.0, %v391
        %393 = vmatmul.f32.gmra.mxu0 %v277
        %v394 = vpop.f32.mrf.mxu0
        %v395 = vadd.f32 0.0, %v394
        %396 = vmatmul.f32.gmra.mxu0 %v280
        %v397 = vpop.f32.mrf.mxu0
        %v398 = vadd.f32 0.0, %v397
        %399 = vmatmul.f32.gmra.mxu0 %v283
        %v400 = vpop.f32.mrf.mxu0
        %v401 = vadd.f32 0.0, %v400
        %402 = vmatmul.f32.gmra.mxu0 %v286
        %v403 = vpop.f32.mrf.mxu0
        %v404 = vadd.f32 0.0, %v403
        %405 = vmatmul.f32.gmra.mxu0 %v289
        %v406 = vpop.f32.mrf.mxu0
        %v407 = vadd.f32 0.0, %v406
        %408 = vmatmul.f32.gmra.mxu0 %v292
        %v409 = vpop.f32.mrf.mxu0
        %v410 = vadd.f32 0.0, %v409
        %411 = vmatmul.f32.gmra.mxu0 %v295
        %v412 = vpop.f32.mrf.mxu0
        %v413 = vadd.f32 0.0, %v412
        %414 = vmatmul.f32.gmra.mxu0 %v298
        %v415 = vpop.f32.mrf.mxu0
        %v416 = vadd.f32 0.0, %v415
        %417 = vmatmul.f32.gmra.mxu0 %v301
        %v418 = vpop.f32.mrf.mxu0
        %v419 = vadd.f32 0.0, %v418
        %420 = vmatmul.f32.gmra.mxu0 %v304
        %v421 = vpop.f32.mrf.mxu0
        %v422 = vadd.f32 0.0, %v421
        %423 = vmatmul.f32.gmra.mxu0 %v307
        %v424 = vpop.f32.mrf.mxu0
        %v425 = vadd.f32 0.0, %v424
        %426 = vmatmul.f32.gmra.mxu0 %v310
        %v427 = vpop.f32.mrf.mxu0
        %v428 = vadd.f32 0.0, %v427
        %429 = vmatmul.f32.gmra.mxu0 %v313
        %v430 = vpop.f32.mrf.mxu0
        %v431 = vadd.f32 0.0, %v430
        %432 = vmatmul.f32.gmra.mxu0 %v316
        %v433 = vpop.f32.mrf.mxu0
        %v434 = vadd.f32 0.0, %v433
        %435 = vmatmul.f32.gmra.mxu0 %v319
        %v436 = vpop.f32.mrf.mxu0
        %v437 = vadd.f32 0.0, %v436
        %438 = vmatmul.f32.gmra.mxu0 %v322
        %v439 = vpop.f32.mrf.mxu0
        %v440 = vadd.f32 0.0, %v439
        %441 = vmatmul.f32.gmra.mxu0 %v325
        %v442 = vpop.f32.mrf.mxu0
        %v443 = vadd.f32 0.0, %v442
        %444 = vdwg.mxu0
        %445 = vmatpush.msra.mxu0 0.0
        %446 = vmatpush.msra.mxu0 0.0
        %447 = vmatpush.msra.mxu0 0.0
        %448 = vmatpush.msra.mxu0 0.0
        %449 = vmatpush.msra.mxu0 0.0
        %450 = vmatpush.msra.mxu0 0.0
        %451 = vmatpush.msra.mxu0 0.0
        %452 = vmatpush.msra.mxu0 0.0
        %453 = vmatpush.msra.mxu0 0.0
        %454 = vmatpush.msra.mxu0 0.0
        %455 = vmatpush.msra.mxu0 0.0
        %456 = vmatpush.msra.mxu0 0.0
        %457 = vmatpush.msra.mxu0 0.0
        %458 = vmatpush.msra.mxu0 0.0
        %459 = vmatpush.msra.mxu0 0.0
        %460 = vmatpush.msra.mxu0 %v330
        %461 = vmatmul.f32.gmra.mxu0 %v232
        %v462 = vpop.f32.mrf.mxu0
        %v463 = vadd.f32 0.0, %v462
        %464 = vmatmul.f32.gmra.mxu0 %v235
        %v465 = vpop.f32.mrf.mxu0
        %v466 = vadd.f32 0.0, %v465
        %467 = vmatmul.f32.gmra.mxu0 %v238
        %v468 = vpop.f32.mrf.mxu0
        %v469 = vadd.f32 0.0, %v468
        %470 = vmatmul.f32.gmra.mxu0 %v241
        %v471 = vpop.f32.mrf.mxu0
        %v472 = vadd.f32 0.0, %v471
        %473 = vmatmul.f32.gmra.mxu0 %v244
        %v474 = vpop.f32.mrf.mxu0
        %v475 = vadd.f32 0.0, %v474
        %476 = vmatmul.f32.gmra.mxu0 %v247
        %v477 = vpop.f32.mrf.mxu0
        %v478 = vadd.f32 0.0, %v477
        %479 = vmatmul.f32.gmra.mxu0 %v250
        %v480 = vpop.f32.mrf.mxu0
        %v481 = vadd.f32 0.0, %v480
        %482 = vmatmul.f32.gmra.mxu0 %v253
        %v483 = vpop.f32.mrf.mxu0
        %v484 = vadd.f32 0.0, %v483
        %485 = vmatmul.f32.gmra.mxu0 %v256
        %v486 = vpop.f32.mrf.mxu0
        %v487 = vadd.f32 0.0, %v486
        %488 = vmatmul.f32.gmra.mxu0 %v259
        %v489 = vpop.f32.mrf.mxu0
        %v490 = vadd.f32 0.0, %v489
        %491 = vmatmul.f32.gmra.mxu0 %v262
        %v492 = vpop.f32.mrf.mxu0
        %v493 = vadd.f32 0.0, %v492
        %494 = vmatmul.f32.gmra.mxu0 %v265
        %v495 = vpop.f32.mrf.mxu0
        %v496 = vadd.f32 0.0, %v495
        %497 = vmatmul.f32.gmra.mxu0 %v268
        %v498 = vpop.f32.mrf.mxu0
        %v499 = vadd.f32 0.0, %v498
        %500 = vmatmul.f32.gmra.mxu0 %v271
        %v501 = vpop.f32.mrf.mxu0
        %v502 = vadd.f32 0.0, %v501
        %503 = vmatmul.f32.gmra.mxu0 %v274
        %v504 = vpop.f32.mrf.mxu0
        %v505 = vadd.f32 0.0, %v504
        %506 = vmatmul.f32.gmra.mxu0 %v277
        %v507 = vpop.f32.mrf.mxu0
        %v508 = vadd.f32 0.0, %v507
        %509 = vmatmul.f32.gmra.mxu0 %v280
        %v510 = vpop.f32.mrf.mxu0
        %v511 = vadd.f32 0.0, %v510
        %512 = vmatmul.f32.gmra.mxu0 %v283
        %v513 = vpop.f32.mrf.mxu0
        %v514 = vadd.f32 0.0, %v513
        %515 = vmatmul.f32.gmra.mxu0 %v286
        %v516 = vpop.f32.mrf.mxu0
        %v517 = vadd.f32 0.0, %v516
        %518 = vmatmul.f32.gmra.mxu0 %v289
        %v519 = vpop.f32.mrf.mxu0
        %v520 = vadd.f32 0.0, %v519
        %521 = vmatmul.f32.gmra.mxu0 %v292
        %v522 = vpop.f32.mrf.mxu0
        %v523 = vadd.f32 0.0, %v522
        %524 = vmatmul.f32.gmra.mxu0 %v295
        %v525 = vpop.f32.mrf.mxu0
        %v526 = vadd.f32 0.0, %v525
        %527 = vmatmul.f32.gmra.mxu0 %v298
        %v528 = vpop.f32.mrf.mxu0
        %v529 = vadd.f32 0.0, %v528
        %530 = vmatmul.f32.gmra.mxu0 %v301
        %v531 = vpop.f32.mrf.mxu0
        %v532 = vadd.f32 0.0, %v531
        %533 = vmatmul.f32.gmra.mxu0 %v304
        %v534 = vpop.f32.mrf.mxu0
        %v535 = vadd.f32 0.0, %v534
        %536 = vmatmul.f32.gmra.mxu0 %v307
        %v537 = vpop.f32.mrf.mxu0
        %v538 = vadd.f32 0.0, %v537
        %539 = vmatmul.f32.gmra.mxu0 %v310
        %v540 = vpop.f32.mrf.mxu0
        %v541 = vadd.f32 0.0, %v540
        %542 = vmatmul.f32.gmra.mxu0 %v313
        %v543 = vpop.f32.mrf.mxu0
        %v544 = vadd.f32 0.0, %v543
        %545 = vmatmul.f32.gmra.mxu0 %v316
        %v546 = vpop.f32.mrf.mxu0
        %v547 = vadd.f32 0.0, %v546
        %548 = vmatmul.f32.gmra.mxu0 %v319
        %v549 = vpop.f32.mrf.mxu0
        %v550 = vadd.f32 0.0, %v549
        %551 = vmatmul.f32.gmra.mxu0 %v322
        %v552 = vpop.f32.mrf.mxu0
        %v553 = vadd.f32 0.0, %v552
        %554 = vmatmul.f32.gmra.mxu0 %v325
        %v555 = vpop.f32.mrf.mxu0
        %v556 = vadd.f32 0.0, %v555
        %557 = vdwg.mxu0
        %v558 = vmax.f32 %v350, 0.0
        %v559 = vmax.f32 %v463, 0.0
        %v560 = vmax.f32 %v353, 0.0
        %v561 = vmax.f32 %v466, 0.0
        %v562 = vmax.f32 %v356, 0.0
        %v563 = vmax.f32 %v469, 0.0
        %v564 = vmax.f32 %v359, 0.0
        %v565 = vmax.f32 %v472, 0.0
        %v566 = vmax.f32 %v362, 0.0
        %v567 = vmax.f32 %v475, 0.0
        %v568 = vmax.f32 %v365, 0.0
        %v569 = vmax.f32 %v478, 0.0
        %v570 = vmax.f32 %v368, 0.0
        %v571 = vmax.f32 %v481, 0.0
        %v572 = vmax.f32 %v371, 0.0
        %v573 = vmax.f32 %v484, 0.0
        %v574 = vmax.f32 %v374, 0.0
        %v575 = vmax.f32 %v487, 0.0
        %v576 = vmax.f32 %v377, 0.0
        %v577 = vmax.f32 %v490, 0.0
        %v578 = vmax.f32 %v380, 0.0
        %v579 = vmax.f32 %v493, 0.0
        %v580 = vmax.f32 %v383, 0.0
        %v581 = vmax.f32 %v496, 0.0
        %v582 = vmax.f32 %v386, 0.0
        %v583 = vmax.f32 %v499, 0.0
        %v584 = vmax.f32 %v389, 0.0
        %v585 = vmax.f32 %v502, 0.0
        %v586 = vmax.f32 %v392, 0.0
        %v587 = vmax.f32 %v505, 0.0
        %v588 = vmax.f32 %v395, 0.0
        %v589 = vmax.f32 %v508, 0.0
        %v590 = vmax.f32 %v398, 0.0
        %v591 = vmax.f32 %v511, 0.0
        %v592 = vmax.f32 %v401, 0.0
        %v593 = vmax.f32 %v514, 0.0
        %v594 = vmax.f32 %v404, 0.0
        %v595 = vmax.f32 %v517, 0.0
        %v596 = vmax.f32 %v407, 0.0
        %v597 = vmax.f32 %v520, 0.0
        %v598 = vmax.f32 %v410, 0.0
        %v599 = vmax.f32 %v523, 0.0
        %v600 = vmax.f32 %v413, 0.0
        %v601 = vmax.f32 %v526, 0.0
        %v602 = vmax.f32 %v416, 0.0
        %v603 = vmax.f32 %v529, 0.0
        %v604 = vmax.f32 %v419, 0.0
        %v605 = vmax.f32 %v532, 0.0
        %v606 = vmax.f32 %v422, 0.0
        %v607 = vmax.f32 %v535, 0.0
        %v608 = vmax.f32 %v425, 0.0
        %v609 = vmax.f32 %v538, 0.0
        %v610 = vmax.f32 %v428, 0.0
        %v611 = vmax.f32 %v541, 0.0
        %v612 = vmax.f32 %v431, 0.0
        %v613 = vmax.f32 %v544, 0.0
        %v614 = vmax.f32 %v434, 0.0
        %v615 = vmax.f32 %v547, 0.0
        %v616 = vmax.f32 %v437, 0.0
        %v617 = vmax.f32 %v550, 0.0
        %v618 = vmax.f32 %v440, 0.0
        %v619 = vmax.f32 %v553, 0.0
        %v620 = vmax.f32 %v443, 0.0
        %v621 = vmax.f32 %v556, 0.0
        %v622 = vmul.f32 %v558, %v558
        %v623 = vmul.f32 %v559, %v559
        %v624 = vmul.f32 %v560, %v560
        %v625 = vmul.f32 %v561, %v561
        %v626 = vmul.f32 %v562, %v562
        %v627 = vmul.f32 %v563, %v563
        %v628 = vmul.f32 %v564, %v564
        %v629 = vmul.f32 %v565, %v565
        %v630 = vmul.f32 %v566, %v566
        %v631 = vmul.f32 %v567, %v567
        %v632 = vmul.f32 %v568, %v568
        %v633 = vmul.f32 %v569, %v569
        %v634 = vmul.f32 %v570, %v570
        %v635 = vmul.f32 %v571, %v571
        %v636 = vmul.f32 %v572, %v572
        %v637 = vmul.f32 %v573, %v573
        %v638 = vmul.f32 %v574, %v574
        %v639 = vmul.f32 %v575, %v575
        %v640 = vmul.f32 %v576, %v576
        %v641 = vmul.f32 %v577, %v577
        %v642 = vmul.f32 %v578, %v578
        %v643 = vmul.f32 %v579, %v579
        %v644 = vmul.f32 %v580, %v580
        %v645 = vmul.f32 %v581, %v581
        %v646 = vmul.f32 %v582, %v582
        %v647 = vmul.f32 %v583, %v583
        %v648 = vmul.f32 %v584, %v584
        %v649 = vmul.f32 %v585, %v585
        %v650 = vmul.f32 %v586, %v586
        %v651 = vmul.f32 %v587, %v587
        %v652 = vmul.f32 %v588, %v588
        %v653 = vmul.f32 %v589, %v589
        %v654 = vmul.f32 %v590, %v590
        %v655 = vmul.f32 %v591, %v591
        %v656 = vmul.f32 %v592, %v592
        %v657 = vmul.f32 %v593, %v593
        %v658 = vmul.f32 %v594, %v594
        %v659 = vmul.f32 %v595, %v595
        %v660 = vmul.f32 %v596, %v596
        %v661 = vmul.f32 %v597, %v597
        %v662 = vmul.f32 %v598, %v598
        %v663 = vmul.f32 %v599, %v599
        %v664 = vmul.f32 %v600, %v600
        %v665 = vmul.f32 %v601, %v601
        %v666 = vmul.f32 %v602, %v602
        %v667 = vmul.f32 %v603, %v603
        %v668 = vmul.f32 %v604, %v604
        %v669 = vmul.f32 %v605, %v605
        %v670 = vmul.f32 %v606, %v606
        %v671 = vmul.f32 %v607, %v607
        %v672 = vmul.f32 %v608, %v608
        %v673 = vmul.f32 %v609, %v609
        %v674 = vmul.f32 %v610, %v610
        %v675 = vmul.f32 %v611, %v611
        %v676 = vmul.f32 %v612, %v612
        %v677 = vmul.f32 %v613, %v613
        %v678 = vmul.f32 %v614, %v614
        %v679 = vmul.f32 %v615, %v615
        %v680 = vmul.f32 %v616, %v616
        %v681 = vmul.f32 %v617, %v617
        %v682 = vmul.f32 %v618, %v618
        %v683 = vmul.f32 %v619, %v619
        %v684 = vmul.f32 %v620, %v620
        %v685 = vmul.f32 %v621, %v621
        %v686 = vadd.f32 %v622, %v624
        %v687 = vadd.f32 %v686, %v626
        %v688 = vadd.f32 %v687, %v628
        %v689 = vadd.f32 %v688, %v630
        %v690 = vadd.f32 %v689, %v632
        %v691 = vadd.f32 %v690, %v634
        %v692 = vadd.f32 %v691, %v636
        %v693 = vadd.f32 %v692, %v638
        %v694 = vadd.f32 %v693, %v640
        %v695 = vadd.f32 %v694, %v642
        %v696 = vadd.f32 %v695, %v644
        %v697 = vadd.f32 %v696, %v646
        %v698 = vadd.f32 %v697, %v648
        %v699 = vadd.f32 %v698, %v650
        %v700 = vadd.f32 %v699, %v652
        %v701 = vadd.f32 %v700, %v654
        %v702 = vadd.f32 %v701, %v656
        %v703 = vadd.f32 %v702, %v658
        %v704 = vadd.f32 %v703, %v660
        %v705 = vadd.f32 %v704, %v662
        %v706 = vadd.f32 %v705, %v664
        %v707 = vadd.f32 %v706, %v666
        %v708 = vadd.f32 %v707, %v668
        %v709 = vadd.f32 %v708, %v670
        %v710 = vadd.f32 %v709, %v672
        %v711 = vadd.f32 %v710, %v674
        %v712 = vadd.f32 %v711, %v676
        %v713 = vadd.f32 %v712, %v678
        %v714 = vadd.f32 %v713, %v680
        %v715 = vadd.f32 %v714, %v682
        %v716 = vadd.f32 %v715, %v684
        %v717 = vrot.slane %v716, 4
        %v718 = vadd.f32 %v716, %v717
        %v719 = vrot.slane %v718, 2
        %v720 = vadd.f32 %v718, %v719
        %v721 = vrot.slane %v720, 1
        %v722 = vadd.f32 %v720, %v721
        %v723 = vadd.f32 %v623, %v625
        %v724 = vadd.f32 %v723, %v627
        %v725 = vadd.f32 %v724, %v629
        %v726 = vadd.f32 %v725, %v631
        %v727 = vadd.f32 %v726, %v633
        %v728 = vadd.f32 %v727, %v635
        %v729 = vadd.f32 %v728, %v637
        %v730 = vadd.f32 %v729, %v639
        %v731 = vadd.f32 %v730, %v641
        %v732 = vadd.f32 %v731, %v643
        %v733 = vadd.f32 %v732, %v645
        %v734 = vadd.f32 %v733, %v647
        %v735 = vadd.f32 %v734, %v649
        %v736 = vadd.f32 %v735, %v651
        %v737 = vadd.f32 %v736, %v653
        %v738 = vadd.f32 %v737, %v655
        %v739 = vadd.f32 %v738, %v657
        %v740 = vadd.f32 %v739, %v659
        %v741 = vadd.f32 %v740, %v661
        %v742 = vadd.f32 %v741, %v663
        %v743 = vadd.f32 %v742, %v665
        %v744 = vadd.f32 %v743, %v667
        %v745 = vadd.f32 %v744, %v669
        %v746 = vadd.f32 %v745, %v671
        %v747 = vadd.f32 %v746, %v673
        %v748 = vadd.f32 %v747, %v675
        %v749 = vadd.f32 %v748, %v677
        %v750 = vadd.f32 %v749, %v679
        %v751 = vadd.f32 %v750, %v681
        %v752 = vadd.f32 %v751, %v683
        %v753 = vadd.f32 %v752, %v685
        %v754 = vrot.slane %v753, 4
        %v755 = vadd.f32 %v753, %v754
        %v756 = vrot.slane %v755, 2
        %v757 = vadd.f32 %v755, %v756
        %v758 = vrot.slane %v757, 1
        %v759 = vadd.f32 %v757, %v758
        %v760 = vadd.f32 %v722, 1e-06
        %v761 = vadd.f32 %v759, 1e-06
        %v762 = vrsqrt.pop %v760
        %v763 = vmul.f32 %v762, %v760
        %v764 = vmul.f32 %v763, %v762
        %v765 = vmul.f32 0.5, %v764
        %v766 = vsub.f32 1.5, %v765
        %v767 = vmul.f32 %v762, %v766
        %vm768 = vweird.f32 %v760
        %vm769 = vweird.f32 %v762
        %vm770 = vmor %vm768, %vm769
        %v771 = vsel %vm770, %v762, %v767
        %v772 = vrsqrt.pop %v761
        %v773 = vmul.f32 %v772, %v761
        %v774 = vmul.f32 %v773, %v772
        %v775 = vmul.f32 0.5, %v774
        %v776 = vsub.f32 1.5, %v775
        %v777 = vmul.f32 %v772, %v776
        %vm778 = vweird.f32 %v761
        %vm779 = vweird.f32 %v772
        %vm780 = vmor %vm778, %vm779
        %v781 = vsel %vm780, %v772, %v777
        %v782 = vmul.f32 %v558, %v771
        %v783 = vmul.f32 %v559, %v781
        %v784 = vmul.f32 %v560, %v771
        %v785 = vmul.f32 %v561, %v781
        %v786 = vmul.f32 %v562, %v771
        %v787 = vmul.f32 %v563, %v781
        %v788 = vmul.f32 %v564, %v771
        %v789 = vmul.f32 %v565, %v781
        %v790 = vmul.f32 %v566, %v771
        %v791 = vmul.f32 %v567, %v781
        %v792 = vmul.f32 %v568, %v771
        %v793 = vmul.f32 %v569, %v781
        %v794 = vmul.f32 %v570, %v771
        %v795 = vmul.f32 %v571, %v781
        %v796 = vmul.f32 %v572, %v771
        %v797 = vmul.f32 %v573, %v781
        %v798 = vmul.f32 %v574, %v771
        %v799 = vmul.f32 %v575, %v781
        %v800 = vmul.f32 %v576, %v771
        %v801 = vmul.f32 %v577, %v781
        %v802 = vmul.f32 %v578, %v771
        %v803 = vmul.f32 %v579, %v781
        %v804 = vmul.f32 %v580, %v771
        %v805 = vmul.f32 %v581, %v781
        %v806 = vmul.f32 %v582, %v771
        %v807 = vmul.f32 %v583, %v781
        %v808 = vmul.f32 %v584, %v771
        %v809 = vmul.f32 %v585, %v781
        %v810 = vmul.f32 %v586, %v771
        %v811 = vmul.f32 %v587, %v781
        %v812 = vmul.f32 %v588, %v771
        %v813 = vmul.f32 %v589, %v781
        %v814 = vmul.f32 %v590, %v771
        %v815 = vmul.f32 %v591, %v781
        %v816 = vmul.f32 %v592, %v771
        %v817 = vmul.f32 %v593, %v781
        %v818 = vmul.f32 %v594, %v771
        %v819 = vmul.f32 %v595, %v781
        %v820 = vmul.f32 %v596, %v771
        %v821 = vmul.f32 %v597, %v781
        %v822 = vmul.f32 %v598, %v771
        %v823 = vmul.f32 %v599, %v781
        %v824 = vmul.f32 %v600, %v771
        %v825 = vmul.f32 %v601, %v781
        %v826 = vmul.f32 %v602, %v771
        %v827 = vmul.f32 %v603, %v781
        %v828 = vmul.f32 %v604, %v771
        %v829 = vmul.f32 %v605, %v781
        %v830 = vmul.f32 %v606, %v771
        %v831 = vmul.f32 %v607, %v781
        %v832 = vmul.f32 %v608, %v771
        %v833 = vmul.f32 %v609, %v781
        %v834 = vmul.f32 %v610, %v771
        %v835 = vmul.f32 %v611, %v781
        %v836 = vmul.f32 %v612, %v771
        %v837 = vmul.f32 %v613, %v781
        %v838 = vmul.f32 %v614, %v771
        %v839 = vmul.f32 %v615, %v781
        %v840 = vmul.f32 %v616, %v771
        %v841 = vmul.f32 %v617, %v781
        %v842 = vmul.f32 %v618, %v771
        %v843 = vmul.f32 %v619, %v781
        %v844 = vmul.f32 %v620, %v771
        %v845 = vmul.f32 %v621, %v781
        %v846 = vpack.c.bf16 %v783, %v782
        %v847 = vpack.c.bf16 %v785, %v784
        %v848 = vpack.c.bf16 %v787, %v786
        %v849 = vpack.c.bf16 %v789, %v788
        %v850 = vpack.c.bf16 %v791, %v790
        %v851 = vpack.c.bf16 %v793, %v792
        %v852 = vpack.c.bf16 %v795, %v794
        %v853 = vpack.c.bf16 %v797, %v796
        %v854 = vpack.c.bf16 %v799, %v798
        %v855 = vpack.c.bf16 %v801, %v800
        %v856 = vpack.c.bf16 %v803, %v802
        %v857 = vpack.c.bf16 %v805, %v804
        %v858 = vpack.c.bf16 %v807, %v806
        %v859 = vpack.c.bf16 %v809, %v808
        %v860 = vpack.c.bf16 %v811, %v810
        %v861 = vpack.c.bf16 %v813, %v812
        %v862 = vpack.c.bf16 %v815, %v814
        %v863 = vpack.c.bf16 %v817, %v816
        %v864 = vpack.c.bf16 %v819, %v818
        %v865 = vpack.c.bf16 %v821, %v820
        %v866 = vpack.c.bf16 %v823, %v822
        %v867 = vpack.c.bf16 %v825, %v824
        %v868 = vpack.c.bf16 %v827, %v826
        %v869 = vpack.c.bf16 %v829, %v828
        %v870 = vpack.c.bf16 %v831, %v830
        %v871 = vpack.c.bf16 %v833, %v832
        %v872 = vpack.c.bf16 %v835, %v834
        %v873 = vpack.c.bf16 %v837, %v836
        %v874 = vpack.c.bf16 %v839, %v838
        %v875 = vpack.c.bf16 %v841, %v840
        %v876 = vpack.c.bf16 %v843, %v842
        %v877 = vpack.c.bf16 %v845, %v844
        %878 = vst [vmem:[%s176] sm:$0xff] %v846
        %879 = vst [vmem:[%s176 + $0x8] sm:$0xff] %v847
        %880 = vst [vmem:[%s176 + $0x10] sm:$0xff] %v848
        %881 = vst [vmem:[%s176 + $0x18] sm:$0xff] %v849
        %882 = vst [vmem:[%s176 + $0x20] sm:$0xff] %v850
        %883 = vst [vmem:[%s176 + $0x28] sm:$0xff] %v851
        %884 = vst [vmem:[%s176 + $0x30] sm:$0xff] %v852
        %885 = vst [vmem:[%s176 + $0x38] sm:$0xff] %v853
        %886 = vst [vmem:[%s176 + $0x40] sm:$0xff] %v854
        %887 = vst [vmem:[%s176 + $0x48] sm:$0xff] %v855
        %888 = vst [vmem:[%s176 + $0x50] sm:$0xff] %v856
        %889 = vst [vmem:[%s176 + $0x58] sm:$0xff] %v857
        %890 = vst [vmem:[%s176 + $0x60] sm:$0xff] %v858
        %891 = vst [vmem:[%s176 + $0x68] sm:$0xff] %v859
        %892 = vst [vmem:[%s176 + $0x70] sm:$0xff] %v860
        %893 = vst [vmem:[%s176 + $0x78] sm:$0xff] %v861
        %894 = vst [vmem:[%s176 + $0x80] sm:$0xff] %v862
        %895 = vst [vmem:[%s176 + $0x88] sm:$0xff] %v863
        %896 = vst [vmem:[%s176 + $0x90] sm:$0xff] %v864
        %897 = vst [vmem:[%s176 + $0x98] sm:$0xff] %v865
        %898 = vst [vmem:[%s176 + $0xa0] sm:$0xff] %v866
        %899 = vst [vmem:[%s176 + $0xa8] sm:$0xff] %v867
        %900 = vst [vmem:[%s176 + $0xb0] sm:$0xff] %v868
        %901 = vst [vmem:[%s176 + $0xb8] sm:$0xff] %v869
        %902 = vst [vmem:[%s176 + $0xc0] sm:$0xff] %v870
        %903 = vst [vmem:[%s176 + $0xc8] sm:$0xff] %v871
        %904 = vst [vmem:[%s176 + $0xd0] sm:$0xff] %v872
        %905 = vst [vmem:[%s176 + $0xd8] sm:$0xff] %v873
        %906 = vst [vmem:[%s176 + $0xe0] sm:$0xff] %v874
        %907 = vst [vmem:[%s176 + $0xe8] sm:$0xff] %v875
        %908 = vst [vmem:[%s176 + $0xf0] sm:$0xff] %v876
        %909 = vst [vmem:[%s176 + $0xf8] sm:$0xff] %v877
        %s910 = sand.u32 %s92, 1
        %s911 = scalar_lea.sflag [#allocation3], %s910
        %s912 = sand.u32 %s92, 1
        %s913 = smul.addr %s912, 256
        %s914 = scalar_lea.vmem [#allocation2], %s913
        // Predicated region
        $region29: #{tpu_custom_call.1} parent=27 // pred_check
          %p915 = pneg %p102
        $region30: #{tpu_custom_call.1} parent=27 // pred_check_branch
          %917 = sbr.rel (%p915) target = $region32
        $region31: #{tpu_custom_call.1} parent=27 // pred_region
          %s918 = smul.u32 2, %s21
          %920 = vsyncadd %s911, 0
          %s921 = smul.addr %s20, 64
          %s922 = sadd.s32 %s918, %s921
          %s923 = smul.addr %s922, 4
          %s924 = scalar_lea.hbm %s2, %s923
          %s925 = sshll.u32 %s914, 4
          %s926 = int_to_ptr.vmem [resolvable:$true] %s925
          %s927 = sshll.u32 %s924, 4
          %s928 = int_to_ptr.hbm [resolvable:$true] %s927
          %933 = dma.vmem_to_hbm [thread:$0]  %s926, 4096, %s928, %s911, 128, 128, 8
        $region32: #{tpu_custom_call.1} parent=27 // pred_fallthru
          _
      $region28: #{tpu_custom_call.1} parent=5 // pred_fallthru
        _
      %p934 = scmp.le.s32.totalorder 2, %s11
      // Predicated region
      $region33: #{tpu_custom_call.1} parent=5 // pred_check
        %p935 = pneg %p934
      $region34: #{tpu_custom_call.1} parent=5 // pred_check_branch
        %937 = sbr.rel (%p935) target = $region36
      $region35: #{tpu_custom_call.1} parent=5 // pred_region
        %s938 = ssub.s32 %s11, 2
        // Predicated region
        $region37: #{tpu_custom_call.1} parent=35 // pred_check
          %p939 = pneg %p108
        $region38: #{tpu_custom_call.1} parent=35 // pred_check_branch
          %941 = sbr.rel (%p939) target = $region40
        $region39: #{tpu_custom_call.1} parent=35 // pred_region
          %s942 = sand.u32 %s93, 1
          %s943 = scalar_lea.sflag [#allocation3], %s942
          %s944 = sand.u32 %s93, 1
          %s945 = smul.addr %s944, 256
          %s946 = scalar_lea.vmem [#allocation2], %s945
          %948 = dma.done %s943, 4096
        $region40: #{tpu_custom_call.1} parent=35 // pred_fallthru
          _
      $region36: #{tpu_custom_call.1} parent=5 // pred_fallthru
        _
    $region6: #{tpu_custom_call.1} parent=1 // loop_footer
      %s15 = sadd.s32 1, %s11
    $region7: #{tpu_custom_call.1} parent=1 // loop_footer_branch
      %10 = sbr.rel target = $region3
    $region8: #{tpu_custom_call.1} parent=1 // loop_exit
      _
    %949 = vsyncpa [#allocation3], 1
    %s950 = scalar_lea.sflag [#allocation3], 1
    %951 = vsyncpa %s950, 1

</llo_original>
